<compile_context>
chip_gen: v7x
topology: tpu7x:2x2x1
jax: 0.10.0
libtpu: 0.0.40
codegen_flags: <defaults>
</compile_context>

<pallas_src>
import functools

import jax
import jax.numpy as jnp
from jax.experimental import pallas as pl
from jax.experimental.pallas import tpu as pltpu


def _round_up(x, m):
    return ((x + m - 1) // m) * m


def _qnet_kernel(x_ref, w1_ref, b1_ref, w2_ref, b2_ref, o_ref):
    # Cast x tile inside the kernel (no separate XLA pass over x in the wrapper).
    x = x_ref[...].astype(w1_ref.dtype)
    # hidden = sigmoid(x @ W1 + b1); f32 accumulation on the MXU.
    h = jnp.dot(x, w1_ref[...], preferred_element_type=jnp.float32)
    h = h + b1_ref[...].astype(jnp.float32)          # (1, H) row broadcast
    h = 1.0 / (1.0 + jnp.exp(-h))                    # sigmoid, f32 (exp on EUP)
    # out = hidden @ W2 + b2 (hidden cast to param dtype for the MXU pass).
    out = jnp.dot(h.astype(w2_ref.dtype), w2_ref[...],
                  preferred_element_type=jnp.float32)
    out = out + b2_ref[...].astype(jnp.float32)
    o_ref[...] = out.astype(o_ref.dtype)


def prepare_params(w1, b1, w2, b2, param_dtype=jnp.bfloat16):
    """Cast params to the matmul-input dtype; biases reshaped to (1, dim).

    w1: [in, H], b1: [H], w2: [H, O], b2: [O].  No padding is performed:
    full-array blocks are legal for any dims, and padding only inflated DMA.
    """
    w1p = w1.astype(param_dtype)
    b1p = b1.reshape(1, -1).astype(param_dtype)
    w2p = w2.astype(param_dtype)
    b2p = b2.reshape(1, -1).astype(param_dtype)
    return w1p, b1p, w2p, b2p


def _choose_batch_tile(B, block_b):
    """Sublane-aligned batch tile; >=2 grid steps for large B (v7x 2 TCs)."""
    block_b = max(16, _round_up(block_b, 16))
    # Aim for at least 2 grid steps so dimension_semantics=("parallel",) can
    # shard across both TensorCores on v7x; harmless on v5e/v6e.
    tb = _round_up(max(1, -(-B // 2)), 16)   # ceil(B/2) rounded to 16 sublanes
    return min(tb, block_b)


@functools.partial(jax.jit, static_argnames=("block_b",))
def linear_qnet_forward(x, w1p, b1p, w2p, b2p, *, block_b=4096):
    """x: [B, in_features]; params from prepare_params; returns [B, out] f32."""
    B, F = x.shape
    H = w1p.shape[1]
    O = w2p.shape[1]

    tb = _choose_batch_tile(B, block_b)
    grid = (pl.cdiv(B, tb),)                 # ragged last block handled by Pallas

    pdt = jnp.dtype(w1p.dtype).itemsize
    xdt = jnp.dtype(x.dtype).itemsize
    cost = pl.CostEstimate(
        flops=2 * B * (F * H + H * O),
        transcendentals=B * H,
        bytes_accessed=xdt * B * F + pdt * (F * H + H + H * O + O) + 4 * B * O,
    )

    return pl.pallas_call(
        _qnet_kernel,
        out_shape=jax.ShapeDtypeStruct((B, O), jnp.float32),
        grid=grid,
        in_specs=[
            pl.BlockSpec((tb, F), lambda i: (i, 0)),   # x: tiled over batch
            pl.BlockSpec((F, H), lambda i: (0, 0)),    # W1: VMEM-resident
            pl.BlockSpec((1, H), lambda i: (0, 0)),    # b1: VMEM-resident
            pl.BlockSpec((H, O), lambda i: (0, 0)),    # W2: VMEM-resident
            pl.BlockSpec((1, O), lambda i: (0, 0)),    # b2: VMEM-resident
        ],
        out_specs=pl.BlockSpec((tb, O), lambda i: (i, 0)),  # narrow, unpadded
        compiler_params=pltpu.CompilerParams(
            dimension_semantics=("parallel",),         # megacore / v7x 2-TC
        ),
        cost_estimate=cost,
    )(x, w1p, b1p, w2p, b2p)


def init_params(key, input_size, hidden_size, output_size, dtype=jnp.float32):
    """nn.Linear-style uniform(-1/sqrt(fan_in), 1/sqrt(fan_in)) init.

    Weights stored as [in, out] (transpose of PyTorch [out, in]) so the kernel
    computes x @ W directly.
    """
    k1, k2, k3, k4 = jax.random.split(key, 4)
    lim1 = 1.0 / jnp.sqrt(input_size)
    lim2 = 1.0 / jnp.sqrt(hidden_size)
    w1 = jax.random.uniform(k1, (input_size, hidden_size), dtype, -lim1, lim1)
    b1 = jax.random.uniform(k2, (hidden_size,), dtype, -lim1, lim1)
    w2 = jax.random.uniform(k3, (hidden_size, output_size), dtype, -lim2, lim2)
    b2 = jax.random.uniform(k4, (output_size,), dtype, -lim2, lim2)
    return w1, b1, w2, b2


if __name__ == "__main__":
    # TODO(synk): Linear_QNet.save (torch.save file I/O) has no kernel analogue.
    input_size, hidden_size, output_size = 11, 32, 3

    key = jax.random.PRNGKey(0)
    kx, kx2, kp = jax.random.split(key, 3)
    w1, b1, w2, b2 = init_params(kp, input_size, hidden_size, output_size)

    # Plain-JAX reference (same math as the PyTorch forward).
    def ref_fwd(x):
        return jax.nn.sigmoid(x @ w1 + b1[None, :]) @ w2 + b2[None, :]

    # --- f32 params, tiny batch (B=2): single ragged grid step (tb=16 block).
    p32 = prepare_params(w1, b1, w2, b2, param_dtype=jnp.float32)
    x_small = jax.random.normal(kx, (2, input_size), jnp.float32)
    out_small = jax.block_until_ready(linear_qnet_forward(x_small, *p32))
    assert out_small.shape == (2, output_size)
    assert out_small.dtype == jnp.float32
    assert jnp.allclose(out_small, ref_fwd(x_small), atol=1e-5, rtol=1e-5)

    # --- f32 params, larger batch (B=1000): 2 grid steps, ragged last block.
    x_big = jax.random.normal(kx2, (1000, input_size), jnp.float32)
    out_big = jax.block_until_ready(linear_qnet_forward(x_big, *p32))
    assert out_big.shape == (1000, output_size)
    assert jnp.allclose(out_big, ref_fwd(x_big), atol=1e-5, rtol=1e-5)

    # --- bf16 matmul-input path (default), f32 accumulation; looser tolerance.
    p16 = prepare_params(w1, b1, w2, b2)  # param_dtype defaults to bfloat16
    out_bf16 = jax.block_until_ready(linear_qnet_forward(x_big, *p16))
    assert out_bf16.shape == (1000, output_size)
    assert out_bf16.dtype == jnp.float32
    assert jnp.allclose(out_bf16, ref_fwd(x_big), atol=5e-2, rtol=5e-2)

    print("KERNEL_OK")
</pallas_src>

<mosaic_0001>
module attributes {stable_mosaic.version = 11 : i64} {
  func.func @_qnet_kernel(%arg0: i32, %arg1: memref<16x11xf32, #tpu.memory_space<vmem>>, %arg2: memref<11x32xf32, #tpu.memory_space<vmem>>, %arg3: memref<1x32xf32, #tpu.memory_space<vmem>>, %arg4: memref<32x3xf32, #tpu.memory_space<vmem>>, %arg5: memref<1x3xf32, #tpu.memory_space<vmem>>, %arg6: memref<16x3xf32, #tpu.memory_space<vmem>>) attributes {dimension_semantics = [#tpu.dimension_semantics<parallel>], iteration_bounds = array<i64: 1>, scalar_prefetch = 0 : i64, scratch_operands = 0 : i64, tpu.core_type = #tpu.core_type<tc>, window_params = [{transform_indices = @transform_0, window_bounds = array<i64: 16, 11>}, {pipeline_mode = #tpu.pipeline_mode<synchronous>, transform_indices = @transform_1, window_bounds = array<i64: 11, 32>}, {pipeline_mode = #tpu.pipeline_mode<synchronous>, transform_indices = @transform_2, window_bounds = array<i64: 1, 32>}, {pipeline_mode = #tpu.pipeline_mode<synchronous>, transform_indices = @transform_3, window_bounds = array<i64: 32, 3>}, {pipeline_mode = #tpu.pipeline_mode<synchronous>, transform_indices = @transform_4, window_bounds = array<i64: 1, 3>}, {transform_indices = @transform_5, window_bounds = array<i64: 16, 3>}]} {
    %c0 = arith.constant 0 : index
    %c0_0 = arith.constant 0 : index
    %0 = vector.load %arg1[%c0, %c0_0] : memref<16x11xf32, #tpu.memory_space<vmem>>, vector<16x11xf32>
    %c0_1 = arith.constant 0 : index
    %c0_2 = arith.constant 0 : index
    %1 = vector.load %arg2[%c0_1, %c0_2] : memref<11x32xf32, #tpu.memory_space<vmem>>, vector<11x32xf32>
    %cst = arith.constant dense<0.000000e+00> : vector<16x32xf32>
    %2 = tpu.matmul %0, %1, %cst {dimension_numbers = #tpu.dot_dimension_numbers<[1], [0], [0], [1], [0, 0, 1, 1], [], []>} : vector<16x11xf32>, vector<11x32xf32>, vector<16x32xf32> -> vector<16x32xf32>
    %c0_3 = arith.constant 0 : index
    %c0_4 = arith.constant 0 : index
    %3 = vector.load %arg3[%c0_3, %c0_4] : memref<1x32xf32, #tpu.memory_space<vmem>>, vector<1x32xf32>
    %4 = vector.broadcast %3 : vector<1x32xf32> to vector<16x32xf32>
    %5 = arith.addf %2, %4 : vector<16x32xf32>
    %cst_5 = arith.constant 0.000000e+00 : f32
    %6 = vector.broadcast %cst_5 : f32 to vector<16x32xf32>
    %7 = arith.subf %6, %5 : vector<16x32xf32>
    %8 = math.exp %7 : vector<16x32xf32>
    %cst_6 = arith.constant 1.000000e+00 : f32
    %9 = vector.broadcast %cst_6 : f32 to vector<16x32xf32>
    %10 = arith.addf %9, %8 : vector<16x32xf32>
    %cst_7 = arith.constant 1.000000e+00 : f32
    %11 = vector.broadcast %cst_7 : f32 to vector<16x32xf32>
    %12 = arith.divf %11, %10 : vector<16x32xf32>
    %c0_8 = arith.constant 0 : index
    %c0_9 = arith.constant 0 : index
    %13 = vector.load %arg4[%c0_8, %c0_9] : memref<32x3xf32, #tpu.memory_space<vmem>>, vector<32x3xf32>
    %cst_10 = arith.constant dense<0.000000e+00> : vector<16x3xf32>
    %14 = tpu.matmul %12, %13, %cst_10 {dimension_numbers = #tpu.dot_dimension_numbers<[1], [0], [0], [1], [0, 0, 1, 1], [], []>} : vector<16x32xf32>, vector<32x3xf32>, vector<16x3xf32> -> vector<16x3xf32>
    %c0_11 = arith.constant 0 : index
    %c0_12 = arith.constant 0 : index
    %15 = vector.load %arg5[%c0_11, %c0_12] : memref<1x3xf32, #tpu.memory_space<vmem>>, vector<1x3xf32>
    %16 = vector.broadcast %15 : vector<1x3xf32> to vector<16x3xf32>
    %17 = arith.addf %14, %16 : vector<16x3xf32>
    %c0_13 = arith.constant 0 : index
    %c0_14 = arith.constant 0 : index
    %18 = vector.load %arg6[%c0_13, %c0_14] : memref<16x3xf32, #tpu.memory_space<vmem>>, vector<16x3xf32>
    tpu.vector_store %arg6[%c0_13, %c0_14], %17 {strides = array<i32>} : memref<16x3xf32, #tpu.memory_space<vmem>>, vector<16x3xf32>,
    return
  }
  func.func @transform_0(%arg0: i32) -> (i32, i32) {
    %c0_i32 = arith.constant 0 : i32
    %c0_i32_0 = arith.constant 0 : i32
    return %arg0, %c0_i32 : i32, i32
  }
  func.func @transform_1(%arg0: i32) -> (i32, i32) {
    %c0_i32 = arith.constant 0 : i32
    %c0_i32_0 = arith.constant 0 : i32
    %c0_i32_1 = arith.constant 0 : i32
    return %c0_i32, %c0_i32_0 : i32, i32
  }
  func.func @transform_2(%arg0: i32) -> (i32, i32) {
    %c0_i32 = arith.constant 0 : i32
    %c0_i32_0 = arith.constant 0 : i32
    %c0_i32_1 = arith.constant 0 : i32
    return %c0_i32, %c0_i32_0 : i32, i32
  }
  func.func @transform_3(%arg0: i32) -> (i32, i32) {
    %c0_i32 = arith.constant 0 : i32
    %c0_i32_0 = arith.constant 0 : i32
    %c0_i32_1 = arith.constant 0 : i32
    return %c0_i32, %c0_i32_0 : i32, i32
  }
  func.func @transform_4(%arg0: i32) -> (i32, i32) {
    %c0_i32 = arith.constant 0 : i32
    %c0_i32_0 = arith.constant 0 : i32
    %c0_i32_1 = arith.constant 0 : i32
    return %c0_i32, %c0_i32_0 : i32, i32
  }
  func.func @transform_5(%arg0: i32) -> (i32, i32) {
    %c0_i32 = arith.constant 0 : i32
    %c0_i32_0 = arith.constant 0 : i32
    return %arg0, %c0_i32 : i32, i32
  }
}

</mosaic_0001>

<llo_original>
// kernel: linear_qnet_forward.1
$region0: #{linear_qnet_forward.1}
  #allocation0 [shape = 'u32[]', space=smem, size = 0x4, offset = 0x4, fixed_abs, tag = 'smem constant byte address 0x4 - core index']
  #allocation1 [shape = 'u32[144,128]{1,0:T(1,128)}', space=vmem, size = 0x12000, scoped, tag = 'internal scratch']
  %s0 = inlined_call_operand.vmem [shape: f32[2,11], index: 0, kind: input, shape index: {}]
  %s1 = inlined_call_operand.vmem [shape: f32[11,32], index: 1, kind: input, shape index: {}]
  %s2 = inlined_call_operand.vmem [shape: f32[1,32], index: 2, kind: input, shape index: {}]
  %s3 = inlined_call_operand.vmem [shape: f32[32,3], index: 3, kind: input, shape index: {}]
  %s4 = inlined_call_operand.vmem [shape: f32[1,3], index: 4, kind: input, shape index: {}]
  %s5 = inlined_call_operand.hbm [shape: f32[2,3], index: 5, kind: output, shape index: {}]
  %s6 = sld [smem:[#allocation0]]
  $region30: #{linear_qnet_forward.1} parent=0
    _
  %s8 = ssub.s32 1, %s6
  %s9 = scalar_select 0, %s8, %s6
  $region1: #{linear_qnet_forward.1} parent=0
    #allocation2 [shape = 'u8[8192]{0}', space=vmem, size = 0x2000, scoped, tag = 'output window, operand 0, single buffered']
    #allocation3 [shape = 's32[1]{0}', space=sflag, size = 0x4, scoped, tag = 'scoped memory for linear_qnet_forward.1']
    %10 = vsyncpa [#allocation3], 0
    // Predicated region
    $region2: #{linear_qnet_forward.1} parent=1 // pred_check
      _
    $region3: #{linear_qnet_forward.1} parent=1 // pred_check_branch
      %12 = sbr.rel (0) target = $region5
    $region4: #{linear_qnet_forward.1} parent=1 // pred_region
      _
    $region5: #{linear_qnet_forward.1} parent=1 // pred_fallthru
      _
    // Predicated region
    $region6: #{linear_qnet_forward.1} parent=1 // pred_check
      _
    $region7: #{linear_qnet_forward.1} parent=1 // pred_check_branch
      %14 = sbr.rel (0) target = $region9
    $region8: #{linear_qnet_forward.1} parent=1 // pred_region
      _
    $region9: #{linear_qnet_forward.1} parent=1 // pred_fallthru
      _
    // Predicated region
    $region10: #{linear_qnet_forward.1} parent=1 // pred_check
      _
    $region11: #{linear_qnet_forward.1} parent=1 // pred_check_branch
      %16 = sbr.rel (0) target = $region13
    $region12: #{linear_qnet_forward.1} parent=1 // pred_region
      _
    $region13: #{linear_qnet_forward.1} parent=1 // pred_fallthru
      _
    // Predicated region
    $region14: #{linear_qnet_forward.1} parent=1 // pred_check
      _
    $region15: #{linear_qnet_forward.1} parent=1 // pred_check_branch
      %18 = sbr.rel (0) target = $region17
    $region16: #{linear_qnet_forward.1} parent=1 // pred_region
      _
    $region17: #{linear_qnet_forward.1} parent=1 // pred_fallthru
      _
    // Predicated region
    $region18: #{linear_qnet_forward.1} parent=1 // pred_check
      _
    $region19: #{linear_qnet_forward.1} parent=1 // pred_check_branch
      %20 = sbr.rel (0) target = $region21
    $region20: #{linear_qnet_forward.1} parent=1 // pred_region
      _
    $region21: #{linear_qnet_forward.1} parent=1 // pred_fallthru
      _
    %v21 = vld [vmem:[%s0] sm:$0xff]
    %v22 = vld [vmem:[%s0 + $0x8] sm:$0xff]
    %v23 = vld [vmem:[%s1] sm:$0xff]
    %v24 = vld [vmem:[%s1 + $0x8] sm:$0x7]
    %v25 = vld [vmem:[%s2] sm:$0x1]
    %v27 = vlaneseq
    %v28 = vshrl.u32 %v27, 7
    %v29 = vsub.s32 0, %v28
    %v30 = vrot.slane %v25, %v29
    %vm32 = vcmask 89088
    %v34 = vsel %vm32, %v21, 0
    %v37 = vsel %vm32, %v22, 0
    %vm39 = vcmask 1042432
    %v41 = vsel %vm39, %v24, 0
    %43 = vmatprep.subr.mxu0 0.0
    %44 = vmatpush1.msra.mxu0 %v23
    %45 = vmatprep.subr.mxu0 0.0
    %46 = vmatpush1.msra.mxu0 %v41
    %47 = vmatprep.subr.mxu0 0.0
    %48 = vmatpush1.msra.mxu0 0.0
    %49 = vmatprep.subr.mxu0 0.0
    %50 = vmatpush1.msra.mxu0 0.0
    %51 = vmatprep.subr.mxu0 0.0
    %52 = vmatpush1.msra.mxu0 0.0
    %53 = vmatprep.subr.mxu0 0.0
    %54 = vmatpush1.msra.mxu0 0.0
    %55 = vmatprep.subr.mxu0 0.0
    %56 = vmatpush1.msra.mxu0 0.0
    %57 = vmatprep.subr.mxu0 0.0
    %58 = vmatpush1.msra.mxu0 0.0
    %59 = vmatprep.subr.mxu0 0.0
    %60 = vmatpush1.msra.mxu0 0.0
    %61 = vmatprep.subr.mxu0 0.0
    %62 = vmatpush1.msra.mxu0 0.0
    %63 = vmatprep.subr.mxu0 0.0
    %64 = vmatpush1.msra.mxu0 0.0
    %65 = vmatprep.subr.mxu0 0.0
    %66 = vmatpush1.msra.mxu0 0.0
    %67 = vmatprep.subr.mxu0 0.0
    %68 = vmatpush1.msra.mxu0 0.0
    %69 = vmatprep.subr.mxu0 0.0
    %70 = vmatpush1.msra.mxu0 0.0
    %71 = vmatprep.subr.mxu0 0.0
    %72 = vmatpush1.msra.mxu0 0.0
    %73 = vmatprep.subr.mxu0 0.0
    %74 = vmatpush1.msra.mxu0 0.0
    %75 = vmatprep.subr.mxu0 0.0
    %76 = vmatpush1.msra.mxu0 0.0
    %77 = vmatprep.subr.mxu0 0.0
    %78 = vmatpush1.msra.mxu0 0.0
    %79 = vmatprep.subr.mxu0 0.0
    %80 = vmatpush1.msra.mxu0 0.0
    %81 = vmatprep.subr.mxu0 0.0
    %82 = vmatpush1.msra.mxu0 0.0
    %83 = vmatprep.subr.mxu0 0.0
    %84 = vmatpush1.msra.mxu0 0.0
    %85 = vmatprep.subr.mxu0 0.0
    %86 = vmatpush1.msra.mxu0 0.0
    %87 = vmatprep.subr.mxu0 0.0
    %88 = vmatpush1.msra.mxu0 0.0
    %89 = vmatprep.subr.mxu0 0.0
    %90 = vmatpush1.msra.mxu0 0.0
    %91 = vmatprep.subr.mxu0 0.0
    %92 = vmatpush1.msra.mxu0 0.0
    %93 = vmatprep.subr.mxu0 0.0
    %94 = vmatpush1.msra.mxu0 0.0
    %95 = vmatprep.subr.mxu0 0.0
    %96 = vmatpush1.msra.mxu0 0.0
    %97 = vmatprep.subr.mxu0 0.0
    %98 = vmatpush1.msra.mxu0 0.0
    %99 = vmatprep.subr.mxu0 0.0
    %100 = vmatpush1.msra.mxu0 0.0
    %101 = vmatprep.subr.mxu0 0.0
    %102 = vmatpush1.msra.mxu0 0.0
    %103 = vmatprep.subr.mxu0 0.0
    %104 = vmatpush1.msra.mxu0 0.0
    %105 = vmatprep.subr.mxu0 0.0
    %106 = vmatpush1.msra.mxu0 0.0
    %107 = vmatprep.mubr.f32.mxu0 0.0
    %108 = vmatmul.mubr.f32.gmra.mrb[0].mxu0 %v34
    %v109 = vpop.f32.mrb[0].mxu0
    %v110 = vadd.f32 %v30, %v109
    %v111 = vpop.f32.mrb[0].mxu0
    %112 = vmatprep.mubr.f32.mxu0 0.0
    %113 = vmatmul.mubr.f32.gmra.mrb[0].mxu0 %v37
    %v114 = vpop.f32.mrb[0].mxu0
    %v115 = vadd.f32 %v30, %v114
    %v116 = vpop.f32.mrb[0].mxu0
    %117 = vdwg.mxu0
    %v118 = vsub.f32 0.0, %v110
    %v119 = vsub.f32 0.0, %v115
    %v120 = vmul.f32 %v118, 1.442695
    %v121 = vpow.pop %v120
    %v122 = vmul.f32 %v119, 1.442695
    %v123 = vpow.pop %v122
    %v124 = vadd.f32 %v121, 1.0
    %v125 = vadd.f32 %v123, 1.0
    %v126 = vrcp.pop %v124
    %v127 = vmul.f32 1.0, %v126
    %v128 = vrcp.pop %v125
    %v129 = vmul.f32 1.0, %v128
    %v130 = vld [vmem:[%s3] sm:$0xff]
    %v131 = vld [vmem:[%s3 + $0x8] sm:$0xff]
    %v132 = vld [vmem:[%s3 + $0x10] sm:$0xff]
    %v133 = vld [vmem:[%s3 + $0x18] sm:$0xff]
    %v134 = vld [vmem:[%s4] sm:$0x1]
    %v136 = vlaneseq
    %v137 = vshrl.u32 %v136, 7
    %v138 = vsub.s32 0, %v137
    %v139 = vrot.slane %v134, %v138
    %vm141 = vcmask 261120
    %v143 = vsel %vm141, %v127, 0
    %v146 = vsel %vm141, %v129, 0
    %148 = vmatprep.subr.mxu0 0.0
    %149 = vmatpush1.msra.mxu0 %v130
    %150 = vmatprep.subr.mxu0 0.0
    %151 = vmatpush1.msra.mxu0 %v131
    %152 = vmatprep.subr.mxu0 0.0
    %153 = vmatpush1.msra.mxu0 %v132
    %154 = vmatprep.subr.mxu0 0.0
    %155 = vmatpush1.msra.mxu0 %v133
    %156 = vmatprep.subr.mxu0 0.0
    %157 = vmatpush1.msra.mxu0 0.0
    %158 = vmatprep.subr.mxu0 0.0
    %159 = vmatpush1.msra.mxu0 0.0
    %160 = vmatprep.subr.mxu0 0.0
    %161 = vmatpush1.msra.mxu0 0.0
    %162 = vmatprep.subr.mxu0 0.0
    %163 = vmatpush1.msra.mxu0 0.0
    %164 = vmatprep.subr.mxu0 0.0
    %165 = vmatpush1.msra.mxu0 0.0
    %166 = vmatprep.subr.mxu0 0.0
    %167 = vmatpush1.msra.mxu0 0.0
    %168 = vmatprep.subr.mxu0 0.0
    %169 = vmatpush1.msra.mxu0 0.0
    %170 = vmatprep.subr.mxu0 0.0
    %171 = vmatpush1.msra.mxu0 0.0
    %172 = vmatprep.subr.mxu0 0.0
    %173 = vmatpush1.msra.mxu0 0.0
    %174 = vmatprep.subr.mxu0 0.0
    %175 = vmatpush1.msra.mxu0 0.0
    %176 = vmatprep.subr.mxu0 0.0
    %177 = vmatpush1.msra.mxu0 0.0
    %178 = vmatprep.subr.mxu0 0.0
    %179 = vmatpush1.msra.mxu0 0.0
    %180 = vmatprep.subr.mxu0 0.0
    %181 = vmatpush1.msra.mxu0 0.0
    %182 = vmatprep.subr.mxu0 0.0
    %183 = vmatpush1.msra.mxu0 0.0
    %184 = vmatprep.subr.mxu0 0.0
    %185 = vmatpush1.msra.mxu0 0.0
    %186 = vmatprep.subr.mxu0 0.0
    %187 = vmatpush1.msra.mxu0 0.0
    %188 = vmatprep.subr.mxu0 0.0
    %189 = vmatpush1.msra.mxu0 0.0
    %190 = vmatprep.subr.mxu0 0.0
    %191 = vmatpush1.msra.mxu0 0.0
    %192 = vmatprep.subr.mxu0 0.0
    %193 = vmatpush1.msra.mxu0 0.0
    %194 = vmatprep.subr.mxu0 0.0
    %195 = vmatpush1.msra.mxu0 0.0
    %196 = vmatprep.subr.mxu0 0.0
    %197 = vmatpush1.msra.mxu0 0.0
    %198 = vmatprep.subr.mxu0 0.0
    %199 = vmatpush1.msra.mxu0 0.0
    %200 = vmatprep.subr.mxu0 0.0
    %201 = vmatpush1.msra.mxu0 0.0
    %202 = vmatprep.subr.mxu0 0.0
    %203 = vmatpush1.msra.mxu0 0.0
    %204 = vmatprep.subr.mxu0 0.0
    %205 = vmatpush1.msra.mxu0 0.0
    %206 = vmatprep.subr.mxu0 0.0
    %207 = vmatpush1.msra.mxu0 0.0
    %208 = vmatprep.subr.mxu0 0.0
    %209 = vmatpush1.msra.mxu0 0.0
    %210 = vmatprep.subr.mxu0 0.0
    %211 = vmatpush1.msra.mxu0 0.0
    %212 = vmatprep.mubr.f32.mxu0 0.0
    %213 = vmatmul.mubr.f32.gmra.mrb[0].mxu0 %v143
    %v214 = vpop.f32.mrb[0].mxu0
    %v215 = vadd.f32 %v139, %v214
    %v216 = vpop.f32.mrb[0].mxu0
    %217 = vmatprep.mubr.f32.mxu0 0.0
    %218 = vmatmul.mubr.f32.gmra.mrb[0].mxu0 %v146
    %v219 = vpop.f32.mrb[0].mxu0
    %v220 = vadd.f32 %v139, %v219
    %v221 = vpop.f32.mrb[0].mxu0
    %222 = vdwg.mxu0
    %vm223 = vcmask 23552
    %224 = vst.msk [vmem:[#allocation2] sm:$0xff] %vm223, %v215
    %225 = vst.msk [vmem:[#allocation2 + $0x8] sm:$0xff] %vm223, %v220
    // Predicated region
    $region22: #{linear_qnet_forward.1} parent=1 // pred_check
      _
    $region23: #{linear_qnet_forward.1} parent=1 // pred_check_branch
      %227 = sbr.rel (0) target = $region25
    $region24: #{linear_qnet_forward.1} parent=1 // pred_region
      %s229 = ssub.s32 256, 32
      %230 = vsyncadd [#allocation3], %s229
      %s231 = sshll.u32 [#allocation2], 4
      %s232 = int_to_ptr.vmem [resolvable:$true] %s231
      %237 = dma.vmem_to_hbm [thread:$0]  %s232, 32, %s5, [#allocation3], 32, 32, 2
    $region25: #{linear_qnet_forward.1} parent=1 // pred_fallthru
      _
    // Predicated region
    $region26: #{linear_qnet_forward.1} parent=1 // pred_check
      _
    $region27: #{linear_qnet_forward.1} parent=1 // pred_check_branch
      %239 = sbr.rel (0) target = $region29
    $region28: #{linear_qnet_forward.1} parent=1 // pred_region
      %240 = dma.done [#allocation3], 256
    $region29: #{linear_qnet_forward.1} parent=1 // pred_fallthru
      _
    %241 = vsyncpa [#allocation3], 1

</llo_original>
